<compile_context>
chip_gen: v7x
topology: tpu7x:2x2x1
jax: 0.10.0
libtpu: 0.0.40
codegen_flags: <defaults>
</compile_context>

<pallas_src>
import functools

import jax
import jax.numpy as jnp
from jax.experimental import pallas as pl
from jax.experimental.pallas import tpu as pltpu

IN_DIM = 704
HID = 64
OUT_DIM = 128
HID_PAD = 128    # 64 -> full lane width for h1/h2 and fc2/fc3 K


def _round_up(n, m):
    return ((n + m - 1) // m) * m


def dnn_rl_kernel(x_ref, w1_ref, b1_ref, w2_ref, b2_ref, w3_ref, b3_ref, o_ref):
    # Cast x f32 -> bf16 on the VPU (hidden under the streaming DMA); matmuls
    # run bf16 on the MXU with f32 accumulation.
    x = x_ref[...].astype(jnp.bfloat16)

    # fc1 -> sigmoid
    h1 = jnp.dot(x, w1_ref[...], preferred_element_type=jnp.float32)
    h1 = jax.nn.sigmoid(h1 + b1_ref[...])
    # TODO(synk): nn.Dropout(0.3) is identity in eval mode; training-mode RNG mask not implemented.

    # fc2 -> sigmoid
    h2 = jnp.dot(h1.astype(jnp.bfloat16), w2_ref[...],
                 preferred_element_type=jnp.float32)
    h2 = jax.nn.sigmoid(h2 + b2_ref[...])

    # out -> softmax(dim=1)   (exact divide: kernel is mem-bound, divide is free)
    logits = jnp.dot(h2.astype(jnp.bfloat16), w3_ref[...],
                     preferred_element_type=jnp.float32) + b3_ref[...]
    m = jnp.max(logits, axis=-1, keepdims=True)
    e = jnp.exp(logits - m)
    denom = jnp.sum(e, axis=-1, keepdims=True)
    o_ref[...] = (e / denom).astype(o_ref.dtype)


def prepare_params(params):
    """Zero-pad hidden width to lane-dense 128 and cast weights to bf16.

    Zero padding keeps the math exact: padded hidden lanes hold sigmoid(0)=0.5
    but multiply zero rows of the next layer's weights, contributing nothing.
    fc1's K stays at 704 (block last dim == full array dim -> no K pad needed).
    Biases stay f32 (they add into the f32 accumulator).
    """
    w1, b1, w2, b2, w3, b3 = params
    w1p = jnp.zeros((IN_DIM, HID_PAD), jnp.float32).at[:, :HID].set(w1)
    b1p = jnp.zeros((1, HID_PAD), jnp.float32).at[:, :HID].set(b1)
    w2p = jnp.zeros((HID_PAD, HID_PAD), jnp.float32).at[:HID, :HID].set(w2)
    b2p = jnp.zeros((1, HID_PAD), jnp.float32).at[:, :HID].set(b2)
    w3p = jnp.zeros((HID_PAD, OUT_DIM), jnp.float32).at[:HID, :].set(w3)
    b3p = b3.astype(jnp.float32)
    return (w1p.astype(jnp.bfloat16), b1p,
            w2p.astype(jnp.bfloat16), b2p,
            w3p.astype(jnp.bfloat16), b3p)


@functools.partial(jax.jit, static_argnames=("tm", "out_dtype"))
def dnn_rl_forward(x, padded_params, tm=1024, out_dtype=jnp.float32):
    """x: (B, 704) float32. Returns softmax probabilities (B, 128)."""
    w1, b1, w2, b2, w3, b3 = padded_params
    B = x.shape[0]

    # Batch tile: >= 8 (f32 sublane), <= tm (1024 default: large tiles amortize
    # per-step overhead; ~7 MiB footprint fits default scoped VMEM on
    # v5e (16 MiB) / v6e (32 MiB) / v7x (32 MiB per TC)).
    tm_eff = min(tm, _round_up(B, 8))
    num_m = pl.cdiv(B, tm_eff)

    # Weights / biases: one full block, same index every grid step -> resident
    # in VMEM, DMA'd exactly once.
    full = lambda arr: pl.BlockSpec(arr.shape, lambda i: (0,) * arr.ndim)

    out = pl.pallas_call(
        dnn_rl_kernel,
        out_shape=jax.ShapeDtypeStruct((B, OUT_DIM), out_dtype),
        grid=(num_m,),
        in_specs=[
            # x streams directly from HBM, no wrapper pad/cast copy.
            pl.BlockSpec((tm_eff, IN_DIM), lambda i: (i, 0)),
            full(w1), full(b1),
            full(w2), full(b2),
            full(w3), full(b3),
        ],
        out_specs=pl.BlockSpec((tm_eff, OUT_DIM), lambda i: (i, 0)),
        compiler_params=pltpu.CompilerParams(
            dimension_semantics=("parallel",)),
    )(x, w1, b1, w2, b2, w3, b3)
    return out


def init_params(key):
    """Deterministic init mimicking nn.Linear: U(-1/sqrt(fan_in), 1/sqrt(fan_in))."""
    def linear(key, fan_in, fan_out):
        kw, kb = jax.random.split(key)
        bound = 1.0 / jnp.sqrt(fan_in)
        w = jax.random.uniform(kw, (fan_in, fan_out), jnp.float32, -bound, bound)
        b = jax.random.uniform(kb, (1, fan_out), jnp.float32, -bound, bound)
        return w, b

    k1, k2, k3 = jax.random.split(key, 3)
    w1, b1 = linear(k1, IN_DIM, HID)
    w2, b2 = linear(k2, HID, HID)
    w3, b3 = linear(k3, HID, OUT_DIM)
    return (w1, b1, w2, b2, w3, b3)


def reference_forward(x, padded_params):
    """Pure-JAX reference using the same bf16-weight / f32-accumulate math."""
    w1, b1, w2, b2, w3, b3 = padded_params
    xb = x.astype(jnp.bfloat16)
    h1 = jax.nn.sigmoid(jnp.dot(xb, w1, preferred_element_type=jnp.float32) + b1)
    h2 = jax.nn.sigmoid(jnp.dot(h1.astype(jnp.bfloat16), w2,
                                preferred_element_type=jnp.float32) + b2)
    logits = jnp.dot(h2.astype(jnp.bfloat16), w3,
                     preferred_element_type=jnp.float32) + b3
    return jax.nn.softmax(logits, axis=1)


if __name__ == "__main__":
    key = jax.random.PRNGKey(0)
    kx, kp = jax.random.split(key)

    B = 8  # small batch
    x = jax.random.normal(kx, (B, IN_DIM), jnp.float32)
    params = init_params(kp)
    padded_params = prepare_params(params)

    out = dnn_rl_forward(x, padded_params)
    out = jax.block_until_ready(out)

    # sanity: shape, exact row normalization, and match vs pure-JAX reference
    assert out.shape == (B, OUT_DIM)
    assert bool(jnp.all(jnp.isfinite(out)))
    assert jnp.allclose(jnp.sum(out, axis=1), 1.0, atol=1e-3)
    ref = reference_forward(x, padded_params)
    assert jnp.allclose(out, ref, atol=2e-3)

    print("KERNEL_OK")
</pallas_src>

<mosaic_0001>
module attributes {stable_mosaic.version = 11 : i64} {
  func.func @dnn_rl_kernel(%arg0: i32, %arg1: memref<8x704xf32, #tpu.memory_space<vmem>>, %arg2: memref<704x128xbf16, #tpu.memory_space<vmem>>, %arg3: memref<1x128xf32, #tpu.memory_space<vmem>>, %arg4: memref<128x128xbf16, #tpu.memory_space<vmem>>, %arg5: memref<1x128xf32, #tpu.memory_space<vmem>>, %arg6: memref<128x128xbf16, #tpu.memory_space<vmem>>, %arg7: memref<1x128xf32, #tpu.memory_space<vmem>>, %arg8: memref<8x128xf32, #tpu.memory_space<vmem>>) attributes {dimension_semantics = [#tpu.dimension_semantics<parallel>], iteration_bounds = array<i64: 1>, scalar_prefetch = 0 : i64, scratch_operands = 0 : i64, tpu.core_type = #tpu.core_type<tc>, window_params = [{transform_indices = @transform_0, window_bounds = array<i64: 8, 704>}, {pipeline_mode = #tpu.pipeline_mode<synchronous>, transform_indices = @transform_1, window_bounds = array<i64: 704, 128>}, {pipeline_mode = #tpu.pipeline_mode<synchronous>, transform_indices = @transform_2, window_bounds = array<i64: 1, 128>}, {pipeline_mode = #tpu.pipeline_mode<synchronous>, transform_indices = @transform_3, window_bounds = array<i64: 128, 128>}, {pipeline_mode = #tpu.pipeline_mode<synchronous>, transform_indices = @transform_4, window_bounds = array<i64: 1, 128>}, {pipeline_mode = #tpu.pipeline_mode<synchronous>, transform_indices = @transform_5, window_bounds = array<i64: 128, 128>}, {pipeline_mode = #tpu.pipeline_mode<synchronous>, transform_indices = @transform_6, window_bounds = array<i64: 1, 128>}, {transform_indices = @transform_7, window_bounds = array<i64: 8, 128>}]} {
    %c0 = arith.constant 0 : index
    %c0_0 = arith.constant 0 : index
    %0 = vector.load %arg1[%c0, %c0_0] : memref<8x704xf32, #tpu.memory_space<vmem>>, vector<8x704xf32>
    %1 = arith.truncf %0 : vector<8x704xf32> to vector<8x704xbf16>
    %c0_1 = arith.constant 0 : index
    %c0_2 = arith.constant 0 : index
    %2 = vector.load %arg2[%c0_1, %c0_2] : memref<704x128xbf16, #tpu.memory_space<vmem>>, vector<704x128xbf16>
    %cst = arith.constant dense<0.000000e+00> : vector<8x128xf32>
    %3 = tpu.matmul %1, %2, %cst {dimension_numbers = #tpu.dot_dimension_numbers<[1], [0], [0], [1], [0, 0, 1, 1], [], []>} : vector<8x704xbf16>, vector<704x128xbf16>, vector<8x128xf32> -> vector<8x128xf32>
    %c0_3 = arith.constant 0 : index
    %c0_4 = arith.constant 0 : index
    %4 = vector.load %arg3[%c0_3, %c0_4] : memref<1x128xf32, #tpu.memory_space<vmem>>, vector<1x128xf32>
    %5 = vector.broadcast %4 : vector<1x128xf32> to vector<8x128xf32>
    %6 = arith.addf %3, %5 : vector<8x128xf32>
    %7 = arith.negf %6 : vector<8x128xf32>
    %8 = math.exp %7 : vector<8x128xf32>
    %cst_5 = arith.constant 1.000000e+00 : f32
    %9 = vector.broadcast %cst_5 : f32 to vector<8x128xf32>
    %10 = arith.addf %9, %8 : vector<8x128xf32>
    %11 = arith.divf %9, %10 : vector<8x128xf32>
    %12 = arith.truncf %11 : vector<8x128xf32> to vector<8x128xbf16>
    %c0_6 = arith.constant 0 : index
    %c0_7 = arith.constant 0 : index
    %13 = vector.load %arg4[%c0_6, %c0_7] : memref<128x128xbf16, #tpu.memory_space<vmem>>, vector<128x128xbf16>
    %cst_8 = arith.constant dense<0.000000e+00> : vector<8x128xf32>
    %14 = tpu.matmul %12, %13, %cst_8 {dimension_numbers = #tpu.dot_dimension_numbers<[1], [0], [0], [1], [0, 0, 1, 1], [], []>} : vector<8x128xbf16>, vector<128x128xbf16>, vector<8x128xf32> -> vector<8x128xf32>
    %c0_9 = arith.constant 0 : index
    %c0_10 = arith.constant 0 : index
    %15 = vector.load %arg5[%c0_9, %c0_10] : memref<1x128xf32, #tpu.memory_space<vmem>>, vector<1x128xf32>
    %16 = vector.broadcast %15 : vector<1x128xf32> to vector<8x128xf32>
    %17 = arith.addf %14, %16 : vector<8x128xf32>
    %18 = arith.negf %17 : vector<8x128xf32>
    %19 = math.exp %18 : vector<8x128xf32>
    %cst_11 = arith.constant 1.000000e+00 : f32
    %20 = vector.broadcast %cst_11 : f32 to vector<8x128xf32>
    %21 = arith.addf %20, %19 : vector<8x128xf32>
    %22 = arith.divf %20, %21 : vector<8x128xf32>
    %23 = arith.truncf %22 : vector<8x128xf32> to vector<8x128xbf16>
    %c0_12 = arith.constant 0 : index
    %c0_13 = arith.constant 0 : index
    %24 = vector.load %arg6[%c0_12, %c0_13] : memref<128x128xbf16, #tpu.memory_space<vmem>>, vector<128x128xbf16>
    %cst_14 = arith.constant dense<0.000000e+00> : vector<8x128xf32>
    %25 = tpu.matmul %23, %24, %cst_14 {dimension_numbers = #tpu.dot_dimension_numbers<[1], [0], [0], [1], [0, 0, 1, 1], [], []>} : vector<8x128xbf16>, vector<128x128xbf16>, vector<8x128xf32> -> vector<8x128xf32>
    %c0_15 = arith.constant 0 : index
    %c0_16 = arith.constant 0 : index
    %26 = vector.load %arg7[%c0_15, %c0_16] : memref<1x128xf32, #tpu.memory_space<vmem>>, vector<1x128xf32>
    %27 = vector.broadcast %26 : vector<1x128xf32> to vector<8x128xf32>
    %28 = arith.addf %25, %27 : vector<8x128xf32>
    %cst_17 = arith.constant dense<0xFF800000> : vector<8xf32>
    %29 = vector.multi_reduction <maximumf>, %28, %cst_17 [1] : vector<8x128xf32> to vector<8xf32>
    %30 = vector.shape_cast %29 : vector<8xf32> to vector<8x1xf32>
    %31 = vector.broadcast %30 : vector<8x1xf32> to vector<8x128xf32>
    %32 = arith.subf %28, %31 : vector<8x128xf32>
    %33 = math.exp %32 : vector<8x128xf32>
    %cst_18 = arith.constant dense<0.000000e+00> : vector<8xf32>
    %34 = vector.multi_reduction <add>, %33, %cst_18 [1] : vector<8x128xf32> to vector<8xf32>
    %35 = vector.shape_cast %34 : vector<8xf32> to vector<8x1xf32>
    %36 = vector.broadcast %35 : vector<8x1xf32> to vector<8x128xf32>
    %37 = arith.divf %33, %36 : vector<8x128xf32>
    %c0_19 = arith.constant 0 : index
    %c0_20 = arith.constant 0 : index
    %38 = vector.load %arg8[%c0_19, %c0_20] : memref<8x128xf32, #tpu.memory_space<vmem>>, vector<8x128xf32>
    tpu.vector_store %arg8[%c0_19, %c0_20], %37 {strides = array<i32>} : memref<8x128xf32, #tpu.memory_space<vmem>>, vector<8x128xf32>,
    return
  }
  func.func @transform_0(%arg0: i32) -> (i32, i32) {
    %c0_i32 = arith.constant 0 : i32
    %c0_i32_0 = arith.constant 0 : i32
    return %arg0, %c0_i32 : i32, i32
  }
  func.func @transform_1(%arg0: i32) -> (i32, i32) {
    %c0_i32 = arith.constant 0 : i32
    %c0_i32_0 = arith.constant 0 : i32
    %c0_i32_1 = arith.constant 0 : i32
    return %c0_i32, %c0_i32_0 : i32, i32
  }
  func.func @transform_2(%arg0: i32) -> (i32, i32) {
    %c0_i32 = arith.constant 0 : i32
    %c0_i32_0 = arith.constant 0 : i32
    %c0_i32_1 = arith.constant 0 : i32
    return %c0_i32, %c0_i32_0 : i32, i32
  }
  func.func @transform_3(%arg0: i32) -> (i32, i32) {
    %c0_i32 = arith.constant 0 : i32
    %c0_i32_0 = arith.constant 0 : i32
    %c0_i32_1 = arith.constant 0 : i32
    return %c0_i32, %c0_i32_0 : i32, i32
  }
  func.func @transform_4(%arg0: i32) -> (i32, i32) {
    %c0_i32 = arith.constant 0 : i32
    %c0_i32_0 = arith.constant 0 : i32
    %c0_i32_1 = arith.constant 0 : i32
    return %c0_i32, %c0_i32_0 : i32, i32
  }
  func.func @transform_5(%arg0: i32) -> (i32, i32) {
    %c0_i32 = arith.constant 0 : i32
    %c0_i32_0 = arith.constant 0 : i32
    %c0_i32_1 = arith.constant 0 : i32
    return %c0_i32, %c0_i32_0 : i32, i32
  }
  func.func @transform_6(%arg0: i32) -> (i32, i32) {
    %c0_i32 = arith.constant 0 : i32
    %c0_i32_0 = arith.constant 0 : i32
    %c0_i32_1 = arith.constant 0 : i32
    return %c0_i32, %c0_i32_0 : i32, i32
  }
  func.func @transform_7(%arg0: i32) -> (i32, i32) {
    %c0_i32 = arith.constant 0 : i32
    %c0_i32_0 = arith.constant 0 : i32
    return %arg0, %c0_i32 : i32, i32
  }
}

</mosaic_0001>

<llo_original>
// kernel: dnn_rl_forward.1
$region0: #{dnn_rl_forward.1}
  #allocation0 [shape = 'u32[]', space=smem, size = 0x4, offset = 0x4, fixed_abs, tag = 'smem constant byte address 0x4 - core index']
  #allocation1 [shape = 'u32[144,128]{1,0:T(1,128)}', space=vmem, size = 0x12000, scoped, tag = 'internal scratch']
  %s0 = inlined_call_operand.hbm [shape: f32[8,704], index: 0, kind: input, shape index: {}]
  %s1 = inlined_call_operand.hbm [shape: bf16[704,128], index: 1, kind: input, shape index: {}]
  %s2 = inlined_call_operand.vmem [shape: f32[1,128], index: 2, kind: input, shape index: {}]
  %s3 = inlined_call_operand.hbm [shape: bf16[128,128], index: 3, kind: input, shape index: {}]
  %s4 = inlined_call_operand.vmem [shape: f32[1,128], index: 4, kind: input, shape index: {}]
  %s5 = inlined_call_operand.hbm [shape: bf16[128,128], index: 5, kind: input, shape index: {}]
  %s6 = inlined_call_operand.vmem [shape: f32[1,128], index: 6, kind: input, shape index: {}]
  %s7 = inlined_call_operand.hbm [shape: f32[8,128], index: 7, kind: output, shape index: {}]
  %s8 = sld [smem:[#allocation0]]
  $region54: #{dnn_rl_forward.1} parent=0
    _
  %s10 = ssub.s32 1, %s8
  %s11 = scalar_select 0, %s10, %s8
  $region1: #{dnn_rl_forward.1} parent=0
    #allocation2 [shape = 'u8[24576]{0}', space=vmem, size = 0x6000, scoped, tag = 'input window, operand 0, single buffered']
    #allocation3 [shape = 's32[1]{0}', space=sflag, size = 0x4, scoped, tag = 'scoped memory for dnn_rl_forward.1']
    #allocation4 [shape = 's32[1]{0}', space=sflag, size = 0x4, scoped, tag = 'scoped memory for dnn_rl_forward.1']
    #allocation5 [shape = 'u8[180224]{0}', space=vmem, size = 0x2c000, scoped, tag = 'input window, operand 1, single buffered']
    #allocation6 [shape = 's32[1]{0}', space=sflag, size = 0x4, scoped, tag = 'scoped memory for dnn_rl_forward.1']
    #allocation7 [shape = 'u8[32768]{0}', space=vmem, size = 0x8000, scoped, tag = 'input window, operand 3, single buffered']
    #allocation8 [shape = 'u8[32768]{0}', space=vmem, size = 0x8000, scoped, tag = 'input window, operand 5, single buffered']
    #allocation9 [shape = 's32[1]{0}', space=sflag, size = 0x4, scoped, tag = 'scoped memory for dnn_rl_forward.1']
    #allocation10 [shape = 'u8[4096]{0}', space=vmem, size = 0x1000, scoped, tag = 'output window, operand 0, single buffered']
    %12 = vsyncpa [#allocation3], 0
    %13 = vsyncpa [#allocation6], 0
    %14 = vsyncpa [#allocation9], 0
    %15 = vsyncpa [#allocation4], 0
    // Predicated region
    $region2: #{dnn_rl_forward.1} parent=1 // pred_check
      _
    $region3: #{dnn_rl_forward.1} parent=1 // pred_check_branch
      %17 = sbr.rel (0) target = $region5
    $region4: #{dnn_rl_forward.1} parent=1 // pred_region
      %s19 = ssub.s32 768, 768
      %20 = vsyncadd [#allocation3], %s19
      %s22 = sshll.u32 [#allocation2], 4
      %s23 = int_to_ptr.vmem [resolvable:$true] %s22
      %25 = dma.hbm_to_vmem [thread:$0]  %s0, 768, %s23, [#allocation3]
    $region5: #{dnn_rl_forward.1} parent=1 // pred_fallthru
      _
    // Predicated region
    $region6: #{dnn_rl_forward.1} parent=1 // pred_check
      _
    $region7: #{dnn_rl_forward.1} parent=1 // pred_check_branch
      %27 = sbr.rel (0) target = $region9
    $region8: #{dnn_rl_forward.1} parent=1 // pred_region
      %s29 = ssub.s32 5632, 5632
      %30 = vsyncadd [#allocation6], %s29
      %s31 = sshll.u32 [#allocation5], 4
      %s32 = int_to_ptr.vmem [resolvable:$true] %s31
      %37 = dma.hbm_to_vmem [thread:$0]  %s1, 5632, %s32, [#allocation6], 64, 64, 4
    $region9: #{dnn_rl_forward.1} parent=1 // pred_fallthru
      _
    // Predicated region
    $region10: #{dnn_rl_forward.1} parent=1 // pred_check
      _
    $region11: #{dnn_rl_forward.1} parent=1 // pred_check_branch
      %39 = sbr.rel (0) target = $region13
    $region12: #{dnn_rl_forward.1} parent=1 // pred_region
      _
    $region13: #{dnn_rl_forward.1} parent=1 // pred_fallthru
      _
    // Predicated region
    $region14: #{dnn_rl_forward.1} parent=1 // pred_check
      _
    $region15: #{dnn_rl_forward.1} parent=1 // pred_check_branch
      %41 = sbr.rel (0) target = $region17
    $region16: #{dnn_rl_forward.1} parent=1 // pred_region
      %s43 = ssub.s32 1024, 1024
      %44 = vsyncadd [#allocation6], %s43
      %s45 = sshll.u32 [#allocation7], 4
      %s46 = int_to_ptr.vmem [resolvable:$true] %s45
      %51 = dma.hbm_to_vmem [thread:$0]  %s3, 1024, %s46, [#allocation6], 64, 64, 4
    $region17: #{dnn_rl_forward.1} parent=1 // pred_fallthru
      _
    // Predicated region
    $region18: #{dnn_rl_forward.1} parent=1 // pred_check
      _
    $region19: #{dnn_rl_forward.1} parent=1 // pred_check_branch
      %53 = sbr.rel (0) target = $region21
    $region20: #{dnn_rl_forward.1} parent=1 // pred_region
      _
    $region21: #{dnn_rl_forward.1} parent=1 // pred_fallthru
      _
    // Predicated region
    $region22: #{dnn_rl_forward.1} parent=1 // pred_check
      _
    $region23: #{dnn_rl_forward.1} parent=1 // pred_check_branch
      %55 = sbr.rel (0) target = $region25
    $region24: #{dnn_rl_forward.1} parent=1 // pred_region
      %s57 = ssub.s32 1024, 1024
      %58 = vsyncadd [#allocation9], %s57
      %s59 = sshll.u32 [#allocation8], 4
      %s60 = int_to_ptr.vmem [resolvable:$true] %s59
      %65 = dma.hbm_to_vmem [thread:$0]  %s5, 1024, %s60, [#allocation9], 64, 64, 4
    $region25: #{dnn_rl_forward.1} parent=1 // pred_fallthru
      _
    // Predicated region
    $region26: #{dnn_rl_forward.1} parent=1 // pred_check
      _
    $region27: #{dnn_rl_forward.1} parent=1 // pred_check_branch
      %67 = sbr.rel (0) target = $region29
    $region28: #{dnn_rl_forward.1} parent=1 // pred_region
      _
    $region29: #{dnn_rl_forward.1} parent=1 // pred_fallthru
      _
    // Predicated region
    $region30: #{dnn_rl_forward.1} parent=1 // pred_check
      _
    $region31: #{dnn_rl_forward.1} parent=1 // pred_check_branch
      %69 = sbr.rel (0) target = $region33
    $region32: #{dnn_rl_forward.1} parent=1 // pred_region
      %70 = dma.done [#allocation3], 768
    $region33: #{dnn_rl_forward.1} parent=1 // pred_fallthru
      _
    // Predicated region
    $region34: #{dnn_rl_forward.1} parent=1 // pred_check
      _
    $region35: #{dnn_rl_forward.1} parent=1 // pred_check_branch
      %72 = sbr.rel (0) target = $region37
    $region36: #{dnn_rl_forward.1} parent=1 // pred_region
      %73 = dma.done [#allocation6], 5632
    $region37: #{dnn_rl_forward.1} parent=1 // pred_fallthru
      _
    // Predicated region
    $region38: #{dnn_rl_forward.1} parent=1 // pred_check
      _
    $region39: #{dnn_rl_forward.1} parent=1 // pred_check_branch
      %75 = sbr.rel (0) target = $region41
    $region40: #{dnn_rl_forward.1} parent=1 // pred_region
      %76 = dma.done [#allocation6], 1024
    $region41: #{dnn_rl_forward.1} parent=1 // pred_fallthru
      _
    // Predicated region
    $region42: #{dnn_rl_forward.1} parent=1 // pred_check
      _
    $region43: #{dnn_rl_forward.1} parent=1 // pred_check_branch
      %78 = sbr.rel (0) target = $region45
    $region44: #{dnn_rl_forward.1} parent=1 // pred_region
      %79 = dma.done [#allocation9], 1024
    $region45: #{dnn_rl_forward.1} parent=1 // pred_fallthru
      _
    %v81 = vld [vmem:[#allocation2] sm:$0xff]
    %v82 = vld [vmem:[#allocation2 + $0x8] sm:$0xff]
    %v83 = vld [vmem:[#allocation2 + $0x10] sm:$0xff]
    %v84 = vld [vmem:[#allocation2 + $0x18] sm:$0xff]
    %v85 = vld [vmem:[#allocation2 + $0x20] sm:$0xff]
    %v86 = vld [vmem:[#allocation2 + $0x28] sm:$0xff]
    %v87 = vpack.c.bf16 %v81, %v81
    %v88 = vpack.c.bf16 %v82, %v82
    %v89 = vpack.c.bf16 %v83, %v83
    %v90 = vpack.c.bf16 %v84, %v84
    %v91 = vpack.c.bf16 %v85, %v85
    %v92 = vpack.c.bf16 %v86, %v86
    %v93 = vld [vmem:[#allocation5] sm:$0xf]
    %v94 = vld [vmem:[#allocation5 + $0x4] sm:$0xf]
    %v95 = vld [vmem:[#allocation5 + $0x8] sm:$0xf]
    %v96 = vld [vmem:[#allocation5 + $0xc] sm:$0xf]
    %v97 = vld [vmem:[#allocation5 + $0x10] sm:$0xf]
    %v98 = vld [vmem:[#allocation5 + $0x14] sm:$0xf]
    %v99 = vld [vmem:[#allocation5 + $0x18] sm:$0xf]
    %v100 = vld [vmem:[#allocation5 + $0x1c] sm:$0xf]
    %v101 = vld [vmem:[#allocation5 + $0x20] sm:$0xf]
    %v102 = vld [vmem:[#allocation5 + $0x24] sm:$0xf]
    %v103 = vld [vmem:[#allocation5 + $0x28] sm:$0xf]
    %v104 = vld [vmem:[#allocation5 + $0x2c] sm:$0xf]
    %v105 = vld [vmem:[#allocation5 + $0x30] sm:$0xf]
    %v106 = vld [vmem:[#allocation5 + $0x34] sm:$0xf]
    %v107 = vld [vmem:[#allocation5 + $0x38] sm:$0xf]
    %v108 = vld [vmem:[#allocation5 + $0x3c] sm:$0xf]
    %v109 = vld [vmem:[#allocation5 + $0x40] sm:$0xf]
    %v110 = vld [vmem:[#allocation5 + $0x44] sm:$0xf]
    %v111 = vld [vmem:[#allocation5 + $0x48] sm:$0xf]
    %v112 = vld [vmem:[#allocation5 + $0x4c] sm:$0xf]
    %v113 = vld [vmem:[#allocation5 + $0x50] sm:$0xf]
    %v114 = vld [vmem:[#allocation5 + $0x54] sm:$0xf]
    %v115 = vld [vmem:[#allocation5 + $0x58] sm:$0xf]
    %v116 = vld [vmem:[#allocation5 + $0x5c] sm:$0xf]
    %v117 = vld [vmem:[#allocation5 + $0x60] sm:$0xf]
    %v118 = vld [vmem:[#allocation5 + $0x64] sm:$0xf]
    %v119 = vld [vmem:[#allocation5 + $0x68] sm:$0xf]
    %v120 = vld [vmem:[#allocation5 + $0x6c] sm:$0xf]
    %v121 = vld [vmem:[#allocation5 + $0x70] sm:$0xf]
    %v122 = vld [vmem:[#allocation5 + $0x74] sm:$0xf]
    %v123 = vld [vmem:[#allocation5 + $0x78] sm:$0xf]
    %v124 = vld [vmem:[#allocation5 + $0x7c] sm:$0xf]
    %v125 = vld [vmem:[#allocation5 + $0x80] sm:$0xf]
    %v126 = vld [vmem:[#allocation5 + $0x84] sm:$0xf]
    %v127 = vld [vmem:[#allocation5 + $0x88] sm:$0xf]
    %v128 = vld [vmem:[#allocation5 + $0x8c] sm:$0xf]
    %v129 = vld [vmem:[#allocation5 + $0x90] sm:$0xf]
    %v130 = vld [vmem:[#allocation5 + $0x94] sm:$0xf]
    %v131 = vld [vmem:[#allocation5 + $0x98] sm:$0xf]
    %v132 = vld [vmem:[#allocation5 + $0x9c] sm:$0xf]
    %v133 = vld [vmem:[#allocation5 + $0xa0] sm:$0xf]
    %v134 = vld [vmem:[#allocation5 + $0xa4] sm:$0xf]
    %v135 = vld [vmem:[#allocation5 + $0xa8] sm:$0xf]
    %v136 = vld [vmem:[#allocation5 + $0xac] sm:$0xf]
    %v137 = vld [vmem:[#allocation5 + $0xb0] sm:$0xf]
    %v138 = vld [vmem:[#allocation5 + $0xb4] sm:$0xf]
    %v139 = vld [vmem:[#allocation5 + $0xb8] sm:$0xf]
    %v140 = vld [vmem:[#allocation5 + $0xbc] sm:$0xf]
    %v141 = vld [vmem:[#allocation5 + $0xc0] sm:$0xf]
    %v142 = vld [vmem:[#allocation5 + $0xc4] sm:$0xf]
    %v143 = vld [vmem:[#allocation5 + $0xc8] sm:$0xf]
    %v144 = vld [vmem:[#allocation5 + $0xcc] sm:$0xf]
    %v145 = vld [vmem:[#allocation5 + $0xd0] sm:$0xf]
    %v146 = vld [vmem:[#allocation5 + $0xd4] sm:$0xf]
    %v147 = vld [vmem:[#allocation5 + $0xd8] sm:$0xf]
    %v148 = vld [vmem:[#allocation5 + $0xdc] sm:$0xf]
    %v149 = vld [vmem:[#allocation5 + $0xe0] sm:$0xf]
    %v150 = vld [vmem:[#allocation5 + $0xe4] sm:$0xf]
    %v151 = vld [vmem:[#allocation5 + $0xe8] sm:$0xf]
    %v152 = vld [vmem:[#allocation5 + $0xec] sm:$0xf]
    %v153 = vld [vmem:[#allocation5 + $0xf0] sm:$0xf]
    %v154 = vld [vmem:[#allocation5 + $0xf4] sm:$0xf]
    %v155 = vld [vmem:[#allocation5 + $0xf8] sm:$0xf]
    %v156 = vld [vmem:[#allocation5 + $0xfc] sm:$0xf]
    %v157 = vld [vmem:[#allocation5 + $0x100] sm:$0xf]
    %v158 = vld [vmem:[#allocation5 + $0x104] sm:$0xf]
    %v159 = vld [vmem:[#allocation5 + $0x108] sm:$0xf]
    %v160 = vld [vmem:[#allocation5 + $0x10c] sm:$0xf]
    %v161 = vld [vmem:[#allocation5 + $0x110] sm:$0xf]
    %v162 = vld [vmem:[#allocation5 + $0x114] sm:$0xf]
    %v163 = vld [vmem:[#allocation5 + $0x118] sm:$0xf]
    %v164 = vld [vmem:[#allocation5 + $0x11c] sm:$0xf]
    %v165 = vld [vmem:[#allocation5 + $0x120] sm:$0xf]
    %v166 = vld [vmem:[#allocation5 + $0x124] sm:$0xf]
    %v167 = vld [vmem:[#allocation5 + $0x128] sm:$0xf]
    %v168 = vld [vmem:[#allocation5 + $0x12c] sm:$0xf]
    %v169 = vld [vmem:[#allocation5 + $0x130] sm:$0xf]
    %v170 = vld [vmem:[#allocation5 + $0x134] sm:$0xf]
    %v171 = vld [vmem:[#allocation5 + $0x138] sm:$0xf]
    %v172 = vld [vmem:[#allocation5 + $0x13c] sm:$0xf]
    %v173 = vld [vmem:[#allocation5 + $0x140] sm:$0xf]
    %v174 = vld [vmem:[#allocation5 + $0x144] sm:$0xf]
    %v175 = vld [vmem:[#allocation5 + $0x148] sm:$0xf]
    %v176 = vld [vmem:[#allocation5 + $0x14c] sm:$0xf]
    %v177 = vld [vmem:[#allocation5 + $0x150] sm:$0xf]
    %v178 = vld [vmem:[#allocation5 + $0x154] sm:$0xf]
    %v179 = vld [vmem:[#allocation5 + $0x158] sm:$0xf]
    %v180 = vld [vmem:[#allocation5 + $0x15c] sm:$0xf]
    %v181 = vld [vmem:[%s2] sm:$0x1]
    %v183 = vlaneseq
    %v184 = vshrl.u32 %v183, 7
    %v185 = vsub.s32 0, %v184
    %v186 = vrot.slane %v181, %v185
    %v276 = vunpack.c.l.b16 %v93
    %v277 = vunpack.c.l.b16 %v94
    %v278 = vunpack.c.l.b16 %v95
    %v279 = vunpack.c.l.b16 %v96
    %v280 = vunpack.c.l.b16 %v97
    %v281 = vunpack.c.l.b16 %v98
    %v282 = vunpack.c.l.b16 %v99
    %v283 = vunpack.c.l.b16 %v100
    %v284 = vunpack.c.l.b16 %v101
    %v285 = vunpack.c.l.b16 %v102
    %v286 = vunpack.c.l.b16 %v103
    %v287 = vunpack.c.l.b16 %v104
    %v288 = vunpack.c.l.b16 %v105
    %v289 = vunpack.c.l.b16 %v106
    %v290 = vunpack.c.l.b16 %v107
    %v291 = vunpack.c.l.b16 %v108
    %v292 = vunpack.c.l.b16 %v109
    %v293 = vunpack.c.l.b16 %v110
    %v294 = vunpack.c.l.b16 %v111
    %v295 = vunpack.c.l.b16 %v112
    %v296 = vunpack.c.l.b16 %v113
    %v297 = vunpack.c.l.b16 %v114
    %v298 = vunpack.c.l.b16 %v115
    %v299 = vunpack.c.l.b16 %v116
    %v300 = vunpack.c.l.b16 %v117
    %v301 = vunpack.c.l.b16 %v118
    %v302 = vunpack.c.l.b16 %v119
    %v303 = vunpack.c.l.b16 %v120
    %v304 = vunpack.c.l.b16 %v121
    %v305 = vunpack.c.l.b16 %v122
    %v306 = vunpack.c.l.b16 %v123
    %v307 = vunpack.c.l.b16 %v124
    %v308 = vunpack.c.l.b16 %v125
    %v309 = vunpack.c.l.b16 %v126
    %v310 = vunpack.c.l.b16 %v127
    %v311 = vunpack.c.l.b16 %v128
    %v312 = vunpack.c.l.b16 %v129
    %v313 = vunpack.c.l.b16 %v130
    %v314 = vunpack.c.l.b16 %v131
    %v315 = vunpack.c.l.b16 %v132
    %v316 = vunpack.c.l.b16 %v133
    %v317 = vunpack.c.l.b16 %v134
    %v318 = vunpack.c.l.b16 %v135
    %v319 = vunpack.c.l.b16 %v136
    %v320 = vunpack.c.l.b16 %v137
    %v321 = vunpack.c.l.b16 %v138
    %v322 = vunpack.c.l.b16 %v139
    %v323 = vunpack.c.l.b16 %v140
    %v324 = vunpack.c.l.b16 %v141
    %v325 = vunpack.c.l.b16 %v142
    %v326 = vunpack.c.l.b16 %v143
    %v327 = vunpack.c.l.b16 %v144
    %v328 = vunpack.c.l.b16 %v145
    %v329 = vunpack.c.l.b16 %v146
    %v330 = vunpack.c.l.b16 %v147
    %v331 = vunpack.c.l.b16 %v148
    %v332 = vunpack.c.l.b16 %v149
    %v333 = vunpack.c.l.b16 %v150
    %v334 = vunpack.c.l.b16 %v151
    %v335 = vunpack.c.l.b16 %v152
    %v336 = vunpack.c.l.b16 %v153
    %v337 = vunpack.c.l.b16 %v154
    %v338 = vunpack.c.l.b16 %v155
    %v339 = vunpack.c.l.b16 %v156
    %v340 = vunpack.c.l.b16 %v157
    %v341 = vunpack.c.l.b16 %v158
    %v342 = vunpack.c.l.b16 %v159
    %v343 = vunpack.c.l.b16 %v160
    %v344 = vunpack.c.l.b16 %v161
    %v345 = vunpack.c.l.b16 %v162
    %v346 = vunpack.c.l.b16 %v163
    %v347 = vunpack.c.l.b16 %v164
    %v348 = vunpack.c.l.b16 %v165
    %v349 = vunpack.c.l.b16 %v166
    %v350 = vunpack.c.l.b16 %v167
    %v351 = vunpack.c.l.b16 %v168
    %v352 = vunpack.c.l.b16 %v169
    %v353 = vunpack.c.l.b16 %v170
    %v354 = vunpack.c.l.b16 %v171
    %v355 = vunpack.c.l.b16 %v172
    %v356 = vunpack.c.l.b16 %v173
    %v357 = vunpack.c.l.b16 %v174
    %v358 = vunpack.c.l.b16 %v175
    %v359 = vunpack.c.l.b16 %v176
    %v360 = vunpack.c.l.b16 %v177
    %v361 = vunpack.c.l.b16 %v178
    %v362 = vunpack.c.l.b16 %v179
    %v363 = vunpack.c.l.b16 %v180
    %v364 = vpack.c.b16 %v277, %v276
    %v365 = vpack.c.b16 %v279, %v278
    %v366 = vpack.c.b16 %v281, %v280
    %v367 = vpack.c.b16 %v283, %v282
    %v368 = vpack.c.b16 %v285, %v284
    %v369 = vpack.c.b16 %v287, %v286
    %v370 = vpack.c.b16 %v289, %v288
    %v371 = vpack.c.b16 %v291, %v290
    %v372 = vpack.c.b16 %v293, %v292
    %v373 = vpack.c.b16 %v295, %v294
    %v374 = vpack.c.b16 %v297, %v296
    %v375 = vpack.c.b16 %v299, %v298
    %v376 = vpack.c.b16 %v301, %v300
    %v377 = vpack.c.b16 %v303, %v302
    %v378 = vpack.c.b16 %v305, %v304
    %v379 = vpack.c.b16 %v307, %v306
    %v380 = vpack.c.b16 %v309, %v308
    %v381 = vpack.c.b16 %v311, %v310
    %v382 = vpack.c.b16 %v313, %v312
    %v383 = vpack.c.b16 %v315, %v314
    %v384 = vpack.c.b16 %v317, %v316
    %v385 = vpack.c.b16 %v319, %v318
    %v386 = vpack.c.b16 %v321, %v320
    %v387 = vpack.c.b16 %v323, %v322
    %v388 = vpack.c.b16 %v325, %v324
    %v389 = vpack.c.b16 %v327, %v326
    %v390 = vpack.c.b16 %v329, %v328
    %v391 = vpack.c.b16 %v331, %v330
    %v392 = vpack.c.b16 %v333, %v332
    %v393 = vpack.c.b16 %v335, %v334
    %v394 = vpack.c.b16 %v337, %v336
    %v395 = vpack.c.b16 %v339, %v338
    %v396 = vpack.c.b16 %v341, %v340
    %v397 = vpack.c.b16 %v343, %v342
    %v398 = vpack.c.b16 %v345, %v344
    %v399 = vpack.c.b16 %v347, %v346
    %v400 = vpack.c.b16 %v349, %v348
    %v401 = vpack.c.b16 %v351, %v350
    %v402 = vpack.c.b16 %v353, %v352
    %v403 = vpack.c.b16 %v355, %v354
    %v404 = vpack.c.b16 %v357, %v356
    %v405 = vpack.c.b16 %v359, %v358
    %v406 = vpack.c.b16 %v361, %v360
    %v407 = vpack.c.b16 %v363, %v362
    %vm452 = vcmask 523264
    %v454 = vsel %vm452, %v92, 0
    %456 = vmatprep.subr.bf16.mxu0 0
    %457 = vmatpush1.bf16.msra.mxu0 %v364
    %458 = vmatprep.subr.bf16.mxu0 0
    %459 = vmatpush1.bf16.msra.mxu0 %v365
    %460 = vmatprep.subr.bf16.mxu0 0
    %461 = vmatpush1.bf16.msra.mxu0 %v366
    %462 = vmatprep.subr.bf16.mxu0 0
    %463 = vmatpush1.bf16.msra.mxu0 %v367
    %464 = vmatprep.subr.bf16.mxu0 0
    %465 = vmatpush1.bf16.msra.mxu0 %v368
    %466 = vmatprep.subr.bf16.mxu0 0
    %467 = vmatpush1.bf16.msra.mxu0 %v369
    %468 = vmatprep.subr.bf16.mxu0 0
    %469 = vmatpush1.bf16.msra.mxu0 %v370
    %470 = vmatprep.subr.bf16.mxu0 0
    %471 = vmatpush1.bf16.msra.mxu0 %v371
    %472 = vmatprep.subr.bf16.mxu0 0
    %473 = vmatpush1.bf16.msra.mxu0 %v372
    %474 = vmatprep.subr.bf16.mxu0 0
    %475 = vmatpush1.bf16.msra.mxu0 %v373
    %476 = vmatprep.subr.bf16.mxu0 0
    %477 = vmatpush1.bf16.msra.mxu0 %v374
    %478 = vmatprep.subr.bf16.mxu0 0
    %479 = vmatpush1.bf16.msra.mxu0 %v375
    %480 = vmatprep.subr.bf16.mxu0 0
    %481 = vmatpush1.bf16.msra.mxu0 %v376
    %482 = vmatprep.subr.bf16.mxu0 0
    %483 = vmatpush1.bf16.msra.mxu0 %v377
    %484 = vmatprep.subr.bf16.mxu0 0
    %485 = vmatpush1.bf16.msra.mxu0 %v378
    %486 = vmatprep.subr.bf16.mxu0 0
    %487 = vmatpush1.bf16.msra.mxu0 %v379
    %488 = vmatprep.mubr.bf16.mxu0 %v88
    %489 = vmatmul.mubr.bf16.gmra.mrb[0].mxu0 %v87
    %v490 = vpop.f32.mrb[0].mxu0
    %v491 = vadd.f32 %v186, %v490
    %v492 = vpop.f32.mrb[0].mxu0
    %v493 = vpop.f32.mrb[0].mxu0
    %v494 = vpop.f32.mrb[0].mxu0
    %495 = vdwg.mxu0
    %496 = vmatprep.subr.bf16.mxu0 0
    %497 = vmatpush1.bf16.msra.mxu0 %v380
    %498 = vmatprep.subr.bf16.mxu0 0
    %499 = vmatpush1.bf16.msra.mxu0 %v381
    %500 = vmatprep.subr.bf16.mxu0 0
    %501 = vmatpush1.bf16.msra.mxu0 %v382
    %502 = vmatprep.subr.bf16.mxu0 0
    %503 = vmatpush1.bf16.msra.mxu0 %v383
    %504 = vmatprep.subr.bf16.mxu0 0
    %505 = vmatpush1.bf16.msra.mxu0 %v384
    %506 = vmatprep.subr.bf16.mxu0 0
    %507 = vmatpush1.bf16.msra.mxu0 %v385
    %508 = vmatprep.subr.bf16.mxu0 0
    %509 = vmatpush1.bf16.msra.mxu0 %v386
    %510 = vmatprep.subr.bf16.mxu0 0
    %511 = vmatpush1.bf16.msra.mxu0 %v387
    %512 = vmatprep.subr.bf16.mxu0 0
    %513 = vmatpush1.bf16.msra.mxu0 %v388
    %514 = vmatprep.subr.bf16.mxu0 0
    %515 = vmatpush1.bf16.msra.mxu0 %v389
    %516 = vmatprep.subr.bf16.mxu0 0
    %517 = vmatpush1.bf16.msra.mxu0 %v390
    %518 = vmatprep.subr.bf16.mxu0 0
    %519 = vmatpush1.bf16.msra.mxu0 %v391
    %520 = vmatprep.subr.bf16.mxu0 0
    %521 = vmatpush1.bf16.msra.mxu0 %v392
    %522 = vmatprep.subr.bf16.mxu0 0
    %523 = vmatpush1.bf16.msra.mxu0 %v393
    %524 = vmatprep.subr.bf16.mxu0 0
    %525 = vmatpush1.bf16.msra.mxu0 %v394
    %526 = vmatprep.subr.bf16.mxu0 0
    %527 = vmatpush1.bf16.msra.mxu0 %v395
    %528 = vmatprep.mubr.bf16.mxu0 %v90
    %529 = vmatmul.mubr.bf16.gmra.mrb[0].mxu0 %v89
    %v530 = vpop.f32.mrb[0].mxu0
    %v531 = vadd.f32 %v491, %v530
    %v532 = vpop.f32.mrb[0].mxu0
    %v533 = vpop.f32.mrb[0].mxu0
    %v534 = vpop.f32.mrb[0].mxu0
    %535 = vdwg.mxu0
    %536 = vmatprep.subr.bf16.mxu0 0
    %537 = vmatpush1.bf16.msra.mxu0 %v396
    %538 = vmatprep.subr.bf16.mxu0 0
    %539 = vmatpush1.bf16.msra.mxu0 %v397
    %540 = vmatprep.subr.bf16.mxu0 0
    %541 = vmatpush1.bf16.msra.mxu0 %v398
    %542 = vmatprep.subr.bf16.mxu0 0
    %543 = vmatpush1.bf16.msra.mxu0 %v399
    %544 = vmatprep.subr.bf16.mxu0 0
    %545 = vmatpush1.bf16.msra.mxu0 %v400
    %546 = vmatprep.subr.bf16.mxu0 0
    %547 = vmatpush1.bf16.msra.mxu0 %v401
    %548 = vmatprep.subr.bf16.mxu0 0
    %549 = vmatpush1.bf16.msra.mxu0 %v402
    %550 = vmatprep.subr.bf16.mxu0 0
    %551 = vmatpush1.bf16.msra.mxu0 %v403
    %552 = vmatprep.subr.bf16.mxu0 0
    %553 = vmatpush1.bf16.msra.mxu0 %v404
    %554 = vmatprep.subr.bf16.mxu0 0
    %555 = vmatpush1.bf16.msra.mxu0 %v405
    %556 = vmatprep.subr.bf16.mxu0 0
    %557 = vmatpush1.bf16.msra.mxu0 %v406
    %558 = vmatprep.subr.bf16.mxu0 0
    %559 = vmatpush1.bf16.msra.mxu0 %v407
    %560 = vmatprep.subr.bf16.mxu0 0
    %561 = vmatpush1.bf16.msra.mxu0 0
    %562 = vmatprep.subr.bf16.mxu0 0
    %563 = vmatpush1.bf16.msra.mxu0 0
    %564 = vmatprep.subr.bf16.mxu0 0
    %565 = vmatpush1.bf16.msra.mxu0 0
    %566 = vmatprep.subr.bf16.mxu0 0
    %567 = vmatpush1.bf16.msra.mxu0 0
    %568 = vmatprep.mubr.bf16.mxu0 %v454
    %569 = vmatmul.mubr.bf16.gmra.mrb[0].mxu0 %v91
    %v570 = vpop.f32.mrb[0].mxu0
    %v571 = vadd.f32 %v531, %v570
    %v572 = vpop.f32.mrb[0].mxu0
    %v573 = vpop.f32.mrb[0].mxu0
    %v574 = vpop.f32.mrb[0].mxu0
    %575 = vdwg.mxu0
    %v576 = vxor.u32 %v571, 2147483648
    %v577 = vmul.f32 %v576, 1.442695
    %v578 = vpow.pop %v577
    %v579 = vadd.f32 %v578, 1.0
    %v580 = vrcp.pop %v579
    %v581 = vmul.f32 1.0, %v580
    %v582 = vpack.c.bf16 %v581, %v581
    %v583 = vld [vmem:[#allocation7] sm:$0xf]
    %v584 = vld [vmem:[#allocation7 + $0x4] sm:$0xf]
    %v585 = vld [vmem:[#allocation7 + $0x8] sm:$0xf]
    %v586 = vld [vmem:[#allocation7 + $0xc] sm:$0xf]
    %v587 = vld [vmem:[#allocation7 + $0x10] sm:$0xf]
    %v588 = vld [vmem:[#allocation7 + $0x14] sm:$0xf]
    %v589 = vld [vmem:[#allocation7 + $0x18] sm:$0xf]
    %v590 = vld [vmem:[#allocation7 + $0x1c] sm:$0xf]
    %v591 = vld [vmem:[#allocation7 + $0x20] sm:$0xf]
    %v592 = vld [vmem:[#allocation7 + $0x24] sm:$0xf]
    %v593 = vld [vmem:[#allocation7 + $0x28] sm:$0xf]
    %v594 = vld [vmem:[#allocation7 + $0x2c] sm:$0xf]
    %v595 = vld [vmem:[#allocation7 + $0x30] sm:$0xf]
    %v596 = vld [vmem:[#allocation7 + $0x34] sm:$0xf]
    %v597 = vld [vmem:[#allocation7 + $0x38] sm:$0xf]
    %v598 = vld [vmem:[#allocation7 + $0x3c] sm:$0xf]
    %v599 = vld [vmem:[%s4] sm:$0x1]
    %v601 = vlaneseq
    %v602 = vshrl.u32 %v601, 7
    %v603 = vsub.s32 0, %v602
    %v604 = vrot.slane %v599, %v603
    %v622 = vunpack.c.l.b16 %v583
    %v623 = vunpack.c.l.b16 %v584
    %v624 = vunpack.c.l.b16 %v585
    %v625 = vunpack.c.l.b16 %v586
    %v626 = vunpack.c.l.b16 %v587
    %v627 = vunpack.c.l.b16 %v588
    %v628 = vunpack.c.l.b16 %v589
    %v629 = vunpack.c.l.b16 %v590
    %v630 = vunpack.c.l.b16 %v591
    %v631 = vunpack.c.l.b16 %v592
    %v632 = vunpack.c.l.b16 %v593
    %v633 = vunpack.c.l.b16 %v594
    %v634 = vunpack.c.l.b16 %v595
    %v635 = vunpack.c.l.b16 %v596
    %v636 = vunpack.c.l.b16 %v597
    %v637 = vunpack.c.l.b16 %v598
    %v638 = vpack.c.b16 %v623, %v622
    %v639 = vpack.c.b16 %v625, %v624
    %v640 = vpack.c.b16 %v627, %v626
    %v641 = vpack.c.b16 %v629, %v628
    %v642 = vpack.c.b16 %v631, %v630
    %v643 = vpack.c.b16 %v633, %v632
    %v644 = vpack.c.b16 %v635, %v634
    %v645 = vpack.c.b16 %v637, %v636
    %654 = vmatprep.subr.bf16.mxu0 0
    %655 = vmatpush1.bf16.msra.mxu0 %v638
    %656 = vmatprep.subr.bf16.mxu0 0
    %657 = vmatpush1.bf16.msra.mxu0 %v639
    %658 = vmatprep.subr.bf16.mxu0 0
    %659 = vmatpush1.bf16.msra.mxu0 %v640
    %660 = vmatprep.subr.bf16.mxu0 0
    %661 = vmatpush1.bf16.msra.mxu0 %v641
    %662 = vmatprep.subr.bf16.mxu0 0
    %663 = vmatpush1.bf16.msra.mxu0 %v642
    %664 = vmatprep.subr.bf16.mxu0 0
    %665 = vmatpush1.bf16.msra.mxu0 %v643
    %666 = vmatprep.subr.bf16.mxu0 0
    %667 = vmatpush1.bf16.msra.mxu0 %v644
    %668 = vmatprep.subr.bf16.mxu0 0
    %669 = vmatpush1.bf16.msra.mxu0 %v645
    %670 = vmatprep.subr.bf16.mxu0 0
    %671 = vmatpush1.bf16.msra.mxu0 0
    %672 = vmatprep.subr.bf16.mxu0 0
    %673 = vmatpush1.bf16.msra.mxu0 0
    %674 = vmatprep.subr.bf16.mxu0 0
    %675 = vmatpush1.bf16.msra.mxu0 0
    %676 = vmatprep.subr.bf16.mxu0 0
    %677 = vmatpush1.bf16.msra.mxu0 0
    %678 = vmatprep.subr.bf16.mxu0 0
    %679 = vmatpush1.bf16.msra.mxu0 0
    %680 = vmatprep.subr.bf16.mxu0 0
    %681 = vmatpush1.bf16.msra.mxu0 0
    %682 = vmatprep.subr.bf16.mxu0 0
    %683 = vmatpush1.bf16.msra.mxu0 0
    %684 = vmatprep.subr.bf16.mxu0 0
    %685 = vmatpush1.bf16.msra.mxu0 0
    %686 = vmatprep.mubr.bf16.mxu0 0
    %687 = vmatmul.mubr.bf16.gmra.mrb[0].mxu0 %v582
    %v688 = vpop.f32.mrb[0].mxu0
    %v689 = vadd.f32 %v604, %v688
    %v690 = vpop.f32.mrb[0].mxu0
    %v691 = vpop.f32.mrb[0].mxu0
    %v692 = vpop.f32.mrb[0].mxu0
    %693 = vdwg.mxu0
    %v694 = vxor.u32 %v689, 2147483648
    %v695 = vmul.f32 %v694, 1.442695
    %v696 = vpow.pop %v695
    %v697 = vadd.f32 %v696, 1.0
    %v698 = vrcp.pop %v697
    %v699 = vmul.f32 1.0, %v698
    %v700 = vpack.c.bf16 %v699, %v699
    %v701 = vld [vmem:[#allocation8] sm:$0xf]
    %v702 = vld [vmem:[#allocation8 + $0x4] sm:$0xf]
    %v703 = vld [vmem:[#allocation8 + $0x8] sm:$0xf]
    %v704 = vld [vmem:[#allocation8 + $0xc] sm:$0xf]
    %v705 = vld [vmem:[#allocation8 + $0x10] sm:$0xf]
    %v706 = vld [vmem:[#allocation8 + $0x14] sm:$0xf]
    %v707 = vld [vmem:[#allocation8 + $0x18] sm:$0xf]
    %v708 = vld [vmem:[#allocation8 + $0x1c] sm:$0xf]
    %v709 = vld [vmem:[#allocation8 + $0x20] sm:$0xf]
    %v710 = vld [vmem:[#allocation8 + $0x24] sm:$0xf]
    %v711 = vld [vmem:[#allocation8 + $0x28] sm:$0xf]
    %v712 = vld [vmem:[#allocation8 + $0x2c] sm:$0xf]
    %v713 = vld [vmem:[#allocation8 + $0x30] sm:$0xf]
    %v714 = vld [vmem:[#allocation8 + $0x34] sm:$0xf]
    %v715 = vld [vmem:[#allocation8 + $0x38] sm:$0xf]
    %v716 = vld [vmem:[#allocation8 + $0x3c] sm:$0xf]
    %v717 = vld [vmem:[%s6] sm:$0x1]
    %v719 = vlaneseq
    %v720 = vshrl.u32 %v719, 7
    %v721 = vsub.s32 0, %v720
    %v722 = vrot.slane %v717, %v721
    %v740 = vunpack.c.l.b16 %v701
    %v741 = vunpack.c.l.b16 %v702
    %v742 = vunpack.c.l.b16 %v703
    %v743 = vunpack.c.l.b16 %v704
    %v744 = vunpack.c.l.b16 %v705
    %v745 = vunpack.c.l.b16 %v706
    %v746 = vunpack.c.l.b16 %v707
    %v747 = vunpack.c.l.b16 %v708
    %v748 = vunpack.c.l.b16 %v709
    %v749 = vunpack.c.l.b16 %v710
    %v750 = vunpack.c.l.b16 %v711
    %v751 = vunpack.c.l.b16 %v712
    %v752 = vunpack.c.l.b16 %v713
    %v753 = vunpack.c.l.b16 %v714
    %v754 = vunpack.c.l.b16 %v715
    %v755 = vunpack.c.l.b16 %v716
    %v756 = vpack.c.b16 %v741, %v740
    %v757 = vpack.c.b16 %v743, %v742
    %v758 = vpack.c.b16 %v745, %v744
    %v759 = vpack.c.b16 %v747, %v746
    %v760 = vpack.c.b16 %v749, %v748
    %v761 = vpack.c.b16 %v751, %v750
    %v762 = vpack.c.b16 %v753, %v752
    %v763 = vpack.c.b16 %v755, %v754
    %772 = vmatprep.subr.bf16.mxu0 0
    %773 = vmatpush1.bf16.msra.mxu0 %v756
    %774 = vmatprep.subr.bf16.mxu0 0
    %775 = vmatpush1.bf16.msra.mxu0 %v757
    %776 = vmatprep.subr.bf16.mxu0 0
    %777 = vmatpush1.bf16.msra.mxu0 %v758
    %778 = vmatprep.subr.bf16.mxu0 0
    %779 = vmatpush1.bf16.msra.mxu0 %v759
    %780 = vmatprep.subr.bf16.mxu0 0
    %781 = vmatpush1.bf16.msra.mxu0 %v760
    %782 = vmatprep.subr.bf16.mxu0 0
    %783 = vmatpush1.bf16.msra.mxu0 %v761
    %784 = vmatprep.subr.bf16.mxu0 0
    %785 = vmatpush1.bf16.msra.mxu0 %v762
    %786 = vmatprep.subr.bf16.mxu0 0
    %787 = vmatpush1.bf16.msra.mxu0 %v763
    %788 = vmatprep.subr.bf16.mxu0 0
    %789 = vmatpush1.bf16.msra.mxu0 0
    %790 = vmatprep.subr.bf16.mxu0 0
    %791 = vmatpush1.bf16.msra.mxu0 0
    %792 = vmatprep.subr.bf16.mxu0 0
    %793 = vmatpush1.bf16.msra.mxu0 0
    %794 = vmatprep.subr.bf16.mxu0 0
    %795 = vmatpush1.bf16.msra.mxu0 0
    %796 = vmatprep.subr.bf16.mxu0 0
    %797 = vmatpush1.bf16.msra.mxu0 0
    %798 = vmatprep.subr.bf16.mxu0 0
    %799 = vmatpush1.bf16.msra.mxu0 0
    %800 = vmatprep.subr.bf16.mxu0 0
    %801 = vmatpush1.bf16.msra.mxu0 0
    %802 = vmatprep.subr.bf16.mxu0 0
    %803 = vmatpush1.bf16.msra.mxu0 0
    %804 = vmatprep.mubr.bf16.mxu0 0
    %805 = vmatmul.mubr.bf16.gmra.mrb[0].mxu0 %v700
    %v806 = vpop.f32.mrb[0].mxu0
    %v807 = vadd.f32 %v722, %v806
    %v808 = vpop.f32.mrb[0].mxu0
    %v809 = vpop.f32.mrb[0].mxu0
    %v810 = vpop.f32.mrb[0].mxu0
    %811 = vdwg.mxu0
    %812 = vmax.xlane.f32.xlu0 %v807
    %v813 = vpop.xlane.xlu0 %812
    %v814 = vsub.f32 %v807, %v813
    %v815 = vmul.f32 %v814, 1.442695
    %v816 = vpow.pop %v815
    %817 = vadd.xlane.f32.xlu0 %v816
    %v818 = vpop.xlane.xlu0 %817
    %v819 = vrcp.pop %v818
    %v820 = vmul.f32 %v816, %v819
    %821 = vst [vmem:[#allocation10] sm:$0xff] %v820
    // Predicated region
    $region46: #{dnn_rl_forward.1} parent=1 // pred_check
      _
    $region47: #{dnn_rl_forward.1} parent=1 // pred_check_branch
      %823 = sbr.rel (0) target = $region49
    $region48: #{dnn_rl_forward.1} parent=1 // pred_region
      %s825 = ssub.s32 128, 128
      %826 = vsyncadd [#allocation4], %s825
      %s828 = sshll.u32 [#allocation10], 4
      %s829 = int_to_ptr.vmem [resolvable:$true] %s828
      %831 = dma.vmem_to_hbm [thread:$0]  %s829, 128, %s7, [#allocation4]
    $region49: #{dnn_rl_forward.1} parent=1 // pred_fallthru
      _
    // Predicated region
    $region50: #{dnn_rl_forward.1} parent=1 // pred_check
      _
    $region51: #{dnn_rl_forward.1} parent=1 // pred_check_branch
      %833 = sbr.rel (0) target = $region53
    $region52: #{dnn_rl_forward.1} parent=1 // pred_region
      %834 = dma.done [#allocation4], 128
    $region53: #{dnn_rl_forward.1} parent=1 // pred_fallthru
      _
    %835 = vsyncpa [#allocation3], 1
    %836 = vsyncpa [#allocation6], 1
    %837 = vsyncpa [#allocation9], 1
    %838 = vsyncpa [#allocation4], 1

</llo_original>
